<compile_context>
chip_gen: v6e
topology: v6e:2x2x1
jax: 0.10.0
libtpu: 0.0.40
codegen_flags: <defaults>
</compile_context>

<pallas_src>
import jax
import jax.numpy as jnp
from jax.experimental import pallas as pl
from jax.experimental.pallas import tpu as pltpu

NEG_SLOPE = 0.01        # F.leaky_relu default negative_slope
TILE_B_MAX = 2048       # per-step footprint ~<6 MiB: safe on v5e/v6e/v7x
LANE = 128


def _round_up(n, m):
    return ((n + m - 1) // m) * m


def _leaky_relu(x):
    # Runs in the dtype of x (bf16 in the kernel) -> half-width VPU select.
    return jnp.where(x > 0, x, NEG_SLOPE * x)


def mlp_kernel(x_ref, w1_ref, b1_ref, w2_ref, b2_ref, w3_ref, b3_ref, o_ref):
    # One batch tile; all three Linear layers + LeakyReLU fused.
    # bf16 MXU matmuls with f32 accumulation; bias add in f32; activation/cast in bf16.
    x = x_ref[...].astype(jnp.bfloat16)
    h1 = jnp.dot(x, w1_ref[...], preferred_element_type=jnp.float32) + b1_ref[...]
    h1 = _leaky_relu(h1.astype(jnp.bfloat16))
    h2 = jnp.dot(h1, w2_ref[...], preferred_element_type=jnp.float32) + b2_ref[...]
    h2 = _leaky_relu(h2.astype(jnp.bfloat16))
    out = jnp.dot(h2, w3_ref[...], preferred_element_type=jnp.float32) + b3_ref[...]
    o_ref[...] = out.astype(o_ref.dtype)


def prepare_params(params):
    """One-time prep (outside the hot path).

    Weights -> bf16 stored [in, out]; biases -> f32 [1, out]. Hidden dims are zero-padded up
    to the next multiple of 128 lanes. This is mathematically exact: padded w1/b1 columns are
    zero -> padded h1 lanes are exactly 0 -> leaky_relu(0)=0 -> padded w2/w3 rows are zero so
    they contribute nothing. The K=75 contraction dim and the N=9 output dim are NOT padded.
    """
    (w1, b1), (w2, b2), (w3, b3) = params
    fin, h1 = w1.shape
    _, h2 = w2.shape
    _, o = w3.shape
    hp1 = _round_up(h1, LANE)   # 100 -> 128
    hp2 = _round_up(h2, LANE)   # 100 -> 128

    w1p = jnp.zeros((fin, hp1), jnp.bfloat16).at[:, :h1].set(w1.astype(jnp.bfloat16))
    b1p = jnp.zeros((1, hp1), jnp.float32).at[:, :h1].set(b1.reshape(1, -1).astype(jnp.float32))
    w2p = jnp.zeros((hp1, hp2), jnp.bfloat16).at[:h1, :h2].set(w2.astype(jnp.bfloat16))
    b2p = jnp.zeros((1, hp2), jnp.float32).at[:, :h2].set(b2.reshape(1, -1).astype(jnp.float32))
    w3p = jnp.zeros((hp2, o), jnp.bfloat16).at[:h2, :].set(w3.astype(jnp.bfloat16))
    b3p = b3.reshape(1, -1).astype(jnp.float32)
    return ((w1p, b1p), (w2p, b2p), (w3p, b3p))


@jax.jit
def net_forward(x, prepped):
    """x: [B, 75] (any float dtype; bf16 preferred upstream) -> [B, 9] float32."""
    (w1, b1), (w2, b2), (w3, b3) = prepped
    B, Fin = x.shape
    H1 = w1.shape[1]   # 128 (padded)
    H2 = w2.shape[1]   # 128 (padded)
    O = w3.shape[1]    # 9

    # Batch tile. Block == full dim is always legal for small B; otherwise use a multiple of 8
    # and ensure the grid has >= 2 steps so v7x's two TensorCores both get work. Pallas masks
    # the last partial block.
    if B <= 8:
        tile_b = B
    else:
        tile_b = min(TILE_B_MAX, max(8, _round_up(pl.cdiv(B, 2), 8)))
    grid = (pl.cdiv(B, tile_b),)

    flops = 2 * B * (Fin * H1 + H1 * H2 + H2 * O)
    bytes_accessed = (
        B * Fin * x.dtype.itemsize + B * O * 4               # x read + out write
        + (Fin * H1 + H1 * H2 + H2 * O) * 2                  # bf16 weights
        + (H1 + H2 + O) * 4                                  # f32 biases
    )

    const = lambda i: (0, 0)
    return pl.pallas_call(
        mlp_kernel,
        out_shape=jax.ShapeDtypeStruct((B, O), jnp.float32),
        grid=grid,
        in_specs=[
            pl.BlockSpec((tile_b, Fin), lambda i: (i, 0)),   # x: streamed per batch tile
            pl.BlockSpec((Fin, H1), const),                  # weights/biases: VMEM-resident
            pl.BlockSpec((1, H1), const),
            pl.BlockSpec((H1, H2), const),
            pl.BlockSpec((1, H2), const),
            pl.BlockSpec((H2, O), const),
            pl.BlockSpec((1, O), const),
        ],
        out_specs=pl.BlockSpec((tile_b, O), lambda i: (i, 0)),
        compiler_params=pltpu.CompilerParams(
            dimension_semantics=("parallel",),               # shards batch tiles on v7x's 2 TCs
            vmem_limit_bytes=32 * 1024 * 1024,               # headroom on v5e, safe on v7x
        ),
        cost_estimate=pl.CostEstimate(
            flops=flops, transcendentals=0, bytes_accessed=bytes_accessed),
    )(x, w1, b1, w2, b2, w3, b3)


def init_params(key):
    """Deterministic init matching nn.Linear: U(-1/sqrt(fan_in), 1/sqrt(fan_in)); W stored [in, out]."""
    def linear(key, fan_in, fan_out):
        kw, kb = jax.random.split(key)
        bound = 1.0 / (fan_in ** 0.5)
        w = jax.random.uniform(kw, (fan_in, fan_out), jnp.float32, -bound, bound)
        b = jax.random.uniform(kb, (fan_out,), jnp.float32, -bound, bound)
        return w, b

    k1, k2, k3 = jax.random.split(key, 3)
    return (linear(k1, 75, 100), linear(k2, 100, 100), linear(k3, 100, 9))


def reference_forward(x, params):
    (w1, b1), (w2, b2), (w3, b3) = params
    x = x.astype(jnp.float32)
    h = jax.nn.leaky_relu(x @ w1 + b1, NEG_SLOPE)
    h = jax.nn.leaky_relu(h @ w2 + b2, NEG_SLOPE)
    return h @ w3 + b3


if __name__ == "__main__":
    key = jax.random.PRNGKey(0)
    kx, kp = jax.random.split(key)

    params = init_params(kp)
    prepped = prepare_params(params)   # one-time: bf16 weights, hidden dims padded to 128

    # Small single-tile case (block == full batch dim).
    B = 4
    x = jax.random.normal(kx, (B, 75), jnp.float32).astype(jnp.bfloat16)  # producer-side bf16
    out = net_forward(x, prepped)
    jax.block_until_ready(out)
    ref = reference_forward(x, params)
    assert out.shape == (B, 9), out.shape
    max_err = float(jnp.max(jnp.abs(out - ref)))
    assert jnp.allclose(out, ref, atol=5e-2, rtol=5e-2), f"mismatch (B=4), max_err={max_err}"

    # Multi-step grid with a partial last tile (exercises the >=2-step / masked-store path).
    B2 = 24
    x2 = jax.random.normal(kx, (B2, 75), jnp.float32).astype(jnp.bfloat16)
    out2 = net_forward(x2, prepped)
    jax.block_until_ready(out2)
    ref2 = reference_forward(x2, params)
    assert out2.shape == (B2, 9), out2.shape
    max_err2 = float(jnp.max(jnp.abs(out2 - ref2)))
    assert jnp.allclose(out2, ref2, atol=5e-2, rtol=5e-2), f"mismatch (B=24), max_err={max_err2}"

    print("KERNEL_OK")
</pallas_src>

<mosaic_0001>
module attributes {stable_mosaic.version = 11 : i64} {
  func.func @mlp_kernel(%arg0: i32, %arg1: memref<4x75xbf16, #tpu.memory_space<vmem>>, %arg2: memref<75x128xbf16, #tpu.memory_space<vmem>>, %arg3: memref<1x128xf32, #tpu.memory_space<vmem>>, %arg4: memref<128x128xbf16, #tpu.memory_space<vmem>>, %arg5: memref<1x128xf32, #tpu.memory_space<vmem>>, %arg6: memref<128x9xbf16, #tpu.memory_space<vmem>>, %arg7: memref<1x9xf32, #tpu.memory_space<vmem>>, %arg8: memref<4x9xf32, #tpu.memory_space<vmem>>) attributes {dimension_semantics = [#tpu.dimension_semantics<parallel>], iteration_bounds = array<i64: 1>, scalar_prefetch = 0 : i64, scratch_operands = 0 : i64, tpu.core_type = #tpu.core_type<tc>, window_params = [{transform_indices = @transform_0, window_bounds = array<i64: 4, 75>}, {pipeline_mode = #tpu.pipeline_mode<synchronous>, transform_indices = @transform_1, window_bounds = array<i64: 75, 128>}, {pipeline_mode = #tpu.pipeline_mode<synchronous>, transform_indices = @transform_2, window_bounds = array<i64: 1, 128>}, {pipeline_mode = #tpu.pipeline_mode<synchronous>, transform_indices = @transform_3, window_bounds = array<i64: 128, 128>}, {pipeline_mode = #tpu.pipeline_mode<synchronous>, transform_indices = @transform_4, window_bounds = array<i64: 1, 128>}, {pipeline_mode = #tpu.pipeline_mode<synchronous>, transform_indices = @transform_5, window_bounds = array<i64: 128, 9>}, {pipeline_mode = #tpu.pipeline_mode<synchronous>, transform_indices = @transform_6, window_bounds = array<i64: 1, 9>}, {transform_indices = @transform_7, window_bounds = array<i64: 4, 9>}]} {
    %c0 = arith.constant 0 : index
    %c0_0 = arith.constant 0 : index
    %0 = vector.load %arg1[%c0, %c0_0] : memref<4x75xbf16, #tpu.memory_space<vmem>>, vector<4x75xbf16>
    %c0_1 = arith.constant 0 : index
    %c0_2 = arith.constant 0 : index
    %1 = vector.load %arg2[%c0_1, %c0_2] : memref<75x128xbf16, #tpu.memory_space<vmem>>, vector<75x128xbf16>
    %cst = arith.constant dense<0.000000e+00> : vector<4x128xf32>
    %2 = tpu.matmul %0, %1, %cst {dimension_numbers = #tpu.dot_dimension_numbers<[1], [0], [0], [1], [0, 0, 1, 1], [], []>} : vector<4x75xbf16>, vector<75x128xbf16>, vector<4x128xf32> -> vector<4x128xf32>
    %c0_3 = arith.constant 0 : index
    %c0_4 = arith.constant 0 : index
    %3 = vector.load %arg3[%c0_3, %c0_4] : memref<1x128xf32, #tpu.memory_space<vmem>>, vector<1x128xf32>
    %4 = vector.broadcast %3 : vector<1x128xf32> to vector<4x128xf32>
    %5 = arith.addf %2, %4 : vector<4x128xf32>
    %6 = arith.truncf %5 : vector<4x128xf32> to vector<4x128xbf16>
    %cst_5 = arith.constant 0.000000e+00 : bf16
    %7 = vector.broadcast %cst_5 : bf16 to vector<4x128xbf16>
    %8 = arith.cmpf ogt, %6, %7 : vector<4x128xbf16>
    %cst_6 = arith.constant 1.000980e-02 : bf16
    %9 = vector.broadcast %cst_6 : bf16 to vector<4x128xbf16>
    %10 = arith.mulf %9, %6 : vector<4x128xbf16>
    %11 = arith.select %8, %6, %10 : vector<4x128xi1>, vector<4x128xbf16>
    %c0_7 = arith.constant 0 : index
    %c0_8 = arith.constant 0 : index
    %12 = vector.load %arg4[%c0_7, %c0_8] : memref<128x128xbf16, #tpu.memory_space<vmem>>, vector<128x128xbf16>
    %cst_9 = arith.constant dense<0.000000e+00> : vector<4x128xf32>
    %13 = tpu.matmul %11, %12, %cst_9 {dimension_numbers = #tpu.dot_dimension_numbers<[1], [0], [0], [1], [0, 0, 1, 1], [], []>} : vector<4x128xbf16>, vector<128x128xbf16>, vector<4x128xf32> -> vector<4x128xf32>
    %c0_10 = arith.constant 0 : index
    %c0_11 = arith.constant 0 : index
    %14 = vector.load %arg5[%c0_10, %c0_11] : memref<1x128xf32, #tpu.memory_space<vmem>>, vector<1x128xf32>
    %15 = vector.broadcast %14 : vector<1x128xf32> to vector<4x128xf32>
    %16 = arith.addf %13, %15 : vector<4x128xf32>
    %17 = arith.truncf %16 : vector<4x128xf32> to vector<4x128xbf16>
    %cst_12 = arith.constant 0.000000e+00 : bf16
    %18 = vector.broadcast %cst_12 : bf16 to vector<4x128xbf16>
    %19 = arith.cmpf ogt, %17, %18 : vector<4x128xbf16>
    %cst_13 = arith.constant 1.000980e-02 : bf16
    %20 = vector.broadcast %cst_13 : bf16 to vector<4x128xbf16>
    %21 = arith.mulf %20, %17 : vector<4x128xbf16>
    %22 = arith.select %19, %17, %21 : vector<4x128xi1>, vector<4x128xbf16>
    %c0_14 = arith.constant 0 : index
    %c0_15 = arith.constant 0 : index
    %23 = vector.load %arg6[%c0_14, %c0_15] : memref<128x9xbf16, #tpu.memory_space<vmem>>, vector<128x9xbf16>
    %cst_16 = arith.constant dense<0.000000e+00> : vector<4x9xf32>
    %24 = tpu.matmul %22, %23, %cst_16 {dimension_numbers = #tpu.dot_dimension_numbers<[1], [0], [0], [1], [0, 0, 1, 1], [], []>} : vector<4x128xbf16>, vector<128x9xbf16>, vector<4x9xf32> -> vector<4x9xf32>
    %c0_17 = arith.constant 0 : index
    %c0_18 = arith.constant 0 : index
    %25 = vector.load %arg7[%c0_17, %c0_18] : memref<1x9xf32, #tpu.memory_space<vmem>>, vector<1x9xf32>
    %26 = vector.broadcast %25 : vector<1x9xf32> to vector<4x9xf32>
    %27 = arith.addf %24, %26 : vector<4x9xf32>
    %c0_19 = arith.constant 0 : index
    %c0_20 = arith.constant 0 : index
    %28 = vector.load %arg8[%c0_19, %c0_20] : memref<4x9xf32, #tpu.memory_space<vmem>>, vector<4x9xf32>
    tpu.vector_store %arg8[%c0_19, %c0_20], %27 {strides = array<i32>} : memref<4x9xf32, #tpu.memory_space<vmem>>, vector<4x9xf32>,
    return
  }
  func.func @transform_0(%arg0: i32) -> (i32, i32) {
    %c0_i32 = arith.constant 0 : i32
    %c0_i32_0 = arith.constant 0 : i32
    return %arg0, %c0_i32 : i32, i32
  }
  func.func @transform_1(%arg0: i32) -> (i32, i32) {
    %c0_i32 = arith.constant 0 : i32
    %c0_i32_0 = arith.constant 0 : i32
    %c0_i32_1 = arith.constant 0 : i32
    return %c0_i32, %c0_i32_0 : i32, i32
  }
  func.func @transform_2(%arg0: i32) -> (i32, i32) {
    %c0_i32 = arith.constant 0 : i32
    %c0_i32_0 = arith.constant 0 : i32
    %c0_i32_1 = arith.constant 0 : i32
    return %c0_i32, %c0_i32_0 : i32, i32
  }
  func.func @transform_3(%arg0: i32) -> (i32, i32) {
    %c0_i32 = arith.constant 0 : i32
    %c0_i32_0 = arith.constant 0 : i32
    %c0_i32_1 = arith.constant 0 : i32
    return %c0_i32, %c0_i32_0 : i32, i32
  }
  func.func @transform_4(%arg0: i32) -> (i32, i32) {
    %c0_i32 = arith.constant 0 : i32
    %c0_i32_0 = arith.constant 0 : i32
    %c0_i32_1 = arith.constant 0 : i32
    return %c0_i32, %c0_i32_0 : i32, i32
  }
  func.func @transform_5(%arg0: i32) -> (i32, i32) {
    %c0_i32 = arith.constant 0 : i32
    %c0_i32_0 = arith.constant 0 : i32
    %c0_i32_1 = arith.constant 0 : i32
    return %c0_i32, %c0_i32_0 : i32, i32
  }
  func.func @transform_6(%arg0: i32) -> (i32, i32) {
    %c0_i32 = arith.constant 0 : i32
    %c0_i32_0 = arith.constant 0 : i32
    %c0_i32_1 = arith.constant 0 : i32
    return %c0_i32, %c0_i32_0 : i32, i32
  }
  func.func @transform_7(%arg0: i32) -> (i32, i32) {
    %c0_i32 = arith.constant 0 : i32
    %c0_i32_0 = arith.constant 0 : i32
    return %arg0, %c0_i32 : i32, i32
  }
}

</mosaic_0001>

<llo_original>
// kernel: net_forward.1
$region0: #{net_forward.1}
  #allocation0 [shape = 'u32[]', space=smem, size = 0x4, offset = 0x4, fixed_abs, tag = 'smem constant byte address 0x4 - core index']
  #allocation1 [shape = 'u32[144,128]{1,0:T(1,128)}', space=vmem, size = 0x12000, scoped, tag = 'internal scratch']
  %s0 = inlined_call_operand.vmem [shape: bf16[4,75], index: 0, kind: input, shape index: {}]
  %s1 = inlined_call_operand.hbm [shape: bf16[75,128], index: 1, kind: input, shape index: {}]
  %s2 = inlined_call_operand.vmem [shape: f32[1,128], index: 2, kind: input, shape index: {}]
  %s3 = inlined_call_operand.vmem [shape: bf16[128,128], index: 3, kind: input, shape index: {}]
  %s4 = inlined_call_operand.vmem [shape: f32[1,128], index: 4, kind: input, shape index: {}]
  %s5 = inlined_call_operand.vmem [shape: bf16[128,9], index: 5, kind: input, shape index: {}]
  %s6 = inlined_call_operand.vmem [shape: f32[1,9], index: 6, kind: input, shape index: {}]
  %s7 = inlined_call_operand.hbm [shape: f32[4,9], index: 7, kind: output, shape index: {}]
  %s8 = sld [smem:[#allocation0]]
  $region42: #{net_forward.1} parent=0
    _
  %s10 = ssub.s32 1, %s8
  %s11 = scalar_select 0, %s10, %s8
  $region1: #{net_forward.1} parent=0
    #allocation2 [shape = 'u8[20480]{0}', space=vmem, size = 0x5000, scoped, tag = 'input window, operand 1, single buffered']
    #allocation3 [shape = 's32[1]{0}', space=sflag, size = 0x4, scoped, tag = 'scoped memory for net_forward.1']
    #allocation4 [shape = 's32[1]{0}', space=sflag, size = 0x4, scoped, tag = 'scoped memory for net_forward.1']
    #allocation5 [shape = 'u8[2048]{0}', space=vmem, size = 0x800, scoped, tag = 'output window, operand 0, single buffered']
    %12 = vsyncpa [#allocation3], 0
    %13 = vsyncpa [#allocation4], 0
    // Predicated region
    $region2: #{net_forward.1} parent=1 // pred_check
      _
    $region3: #{net_forward.1} parent=1 // pred_check_branch
      %15 = sbr.rel (0) target = $region5
    $region4: #{net_forward.1} parent=1 // pred_region
      _
    $region5: #{net_forward.1} parent=1 // pred_fallthru
      _
    // Predicated region
    $region6: #{net_forward.1} parent=1 // pred_check
      _
    $region7: #{net_forward.1} parent=1 // pred_check_branch
      %17 = sbr.rel (0) target = $region9
    $region8: #{net_forward.1} parent=1 // pred_region
      %s19 = ssub.s32 640, 640
      %20 = vsyncadd [#allocation3], %s19
      %s21 = sshll.u32 [#allocation2], 4
      %s22 = int_to_ptr.vmem [resolvable:$true] %s21
      %27 = dma.hbm_to_vmem [thread:$0]  %s1, 640, %s22, [#allocation3], 64, 64, 4
    $region9: #{net_forward.1} parent=1 // pred_fallthru
      _
    // Predicated region
    $region10: #{net_forward.1} parent=1 // pred_check
      _
    $region11: #{net_forward.1} parent=1 // pred_check_branch
      %29 = sbr.rel (0) target = $region13
    $region12: #{net_forward.1} parent=1 // pred_region
      _
    $region13: #{net_forward.1} parent=1 // pred_fallthru
      _
    // Predicated region
    $region14: #{net_forward.1} parent=1 // pred_check
      _
    $region15: #{net_forward.1} parent=1 // pred_check_branch
      %31 = sbr.rel (0) target = $region17
    $region16: #{net_forward.1} parent=1 // pred_region
      _
    $region17: #{net_forward.1} parent=1 // pred_fallthru
      _
    // Predicated region
    $region18: #{net_forward.1} parent=1 // pred_check
      _
    $region19: #{net_forward.1} parent=1 // pred_check_branch
      %33 = sbr.rel (0) target = $region21
    $region20: #{net_forward.1} parent=1 // pred_region
      _
    $region21: #{net_forward.1} parent=1 // pred_fallthru
      _
    // Predicated region
    $region22: #{net_forward.1} parent=1 // pred_check
      _
    $region23: #{net_forward.1} parent=1 // pred_check_branch
      %35 = sbr.rel (0) target = $region25
    $region24: #{net_forward.1} parent=1 // pred_region
      _
    $region25: #{net_forward.1} parent=1 // pred_fallthru
      _
    // Predicated region
    $region26: #{net_forward.1} parent=1 // pred_check
      _
    $region27: #{net_forward.1} parent=1 // pred_check_branch
      %37 = sbr.rel (0) target = $region29
    $region28: #{net_forward.1} parent=1 // pred_region
      _
    $region29: #{net_forward.1} parent=1 // pred_fallthru
      _
    // Predicated region
    $region30: #{net_forward.1} parent=1 // pred_check
      _
    $region31: #{net_forward.1} parent=1 // pred_check_branch
      %39 = sbr.rel (0) target = $region33
    $region32: #{net_forward.1} parent=1 // pred_region
      %40 = dma.done [#allocation3], 640
    $region33: #{net_forward.1} parent=1 // pred_fallthru
      _
    %v43 = vld [vmem:[%s0] sm:$0x3]
    %v44 = vld [vmem:[#allocation2] sm:$0xf]
    %v45 = vld [vmem:[#allocation2 + $0x4] sm:$0xf]
    %v46 = vld [vmem:[#allocation2 + $0x8] sm:$0xf]
    %v47 = vld [vmem:[#allocation2 + $0xc] sm:$0xf]
    %v48 = vld [vmem:[#allocation2 + $0x10] sm:$0xf]
    %v49 = vld [vmem:[#allocation2 + $0x14] sm:$0xf]
    %v50 = vld [vmem:[#allocation2 + $0x18] sm:$0xf]
    %v51 = vld [vmem:[#allocation2 + $0x1c] sm:$0xf]
    %v52 = vld [vmem:[#allocation2 + $0x20] sm:$0xf]
    %v53 = vld [vmem:[#allocation2 + $0x24] sm:$0x3]
    %v54 = vld [vmem:[%s2] sm:$0x1]
    %v56 = vlaneseq
    %v57 = vshrl.u32 %v56, 7
    %v58 = vsub.s32 0, %v57
    %v59 = vrot.slane %v54, %v58
    %v71 = vunpack.c.l.b16 %v44
    %v72 = vunpack.c.l.b16 %v45
    %v73 = vunpack.c.l.b16 %v46
    %v74 = vunpack.c.l.b16 %v47
    %v75 = vunpack.c.l.b16 %v48
    %v76 = vunpack.c.l.b16 %v49
    %v77 = vunpack.c.l.b16 %v50
    %v78 = vunpack.c.l.b16 %v51
    %v79 = vunpack.c.l.b16 %v52
    %v80 = vunpack.c.l.b16 %v53
    %v81 = vpack.c.b16 %v72, %v71
    %v82 = vpack.c.b16 %v74, %v73
    %v83 = vpack.c.b16 %v76, %v75
    %v84 = vpack.c.b16 %v78, %v77
    %v85 = vpack.c.b16 %v80, %v79
    %vm90 = vcmask 613376
    %v92 = vsel %vm90, %v43, 0
    %vm94 = vcmask 1044480
    %vm95 = vcmask 1045504
    %v96 = vsel %vm94, 4294967295, 65535
    %v97 = vsel %vm95, %v96, 0
    %v99 = vand.u32 %v85, %v97
    %101 = vmatprep.subr.bf16.mxu0 0
    %102 = vmatpush1.bf16.msra.mxu0 0
    %103 = vmatprep.subr.bf16.mxu0 0
    %104 = vmatpush1.bf16.msra.mxu0 0
    %105 = vmatprep.subr.bf16.mxu0 0
    %106 = vmatpush1.bf16.msra.mxu0 0
    %107 = vmatprep.subr.bf16.mxu0 0
    %108 = vmatpush1.bf16.msra.mxu0 %v99
    %109 = vmatprep.subr.bf16.mxu0 0
    %110 = vmatpush1.bf16.msra.mxu0 %v84
    %111 = vmatprep.subr.bf16.mxu0 0
    %112 = vmatpush1.bf16.msra.mxu0 %v83
    %113 = vmatprep.subr.bf16.mxu0 0
    %114 = vmatpush1.bf16.msra.mxu0 %v82
    %115 = vmatprep.subr.bf16.mxu0 0
    %116 = vmatpush1.bf16.msra.mxu0 %v81
    %117 = vmatprep.subr.bf16.mxu0 0
    %118 = vmatpush2.bf16.msra.mxu0 0
    %119 = vmatprep.subr.bf16.mxu0 0
    %120 = vmatpush2.bf16.msra.mxu0 0
    %121 = vmatprep.subr.bf16.mxu0 0
    %122 = vmatpush2.bf16.msra.mxu0 0
    %123 = vmatprep.subr.bf16.mxu0 0
    %124 = vmatpush2.bf16.msra.mxu0 0
    %125 = vmatprep.subr.bf16.mxu0 0
    %126 = vmatpush2.bf16.msra.mxu0 0
    %127 = vmatprep.subr.bf16.mxu0 0
    %128 = vmatpush2.bf16.msra.mxu0 0
    %129 = vmatprep.subr.bf16.mxu0 0
    %130 = vmatpush2.bf16.msra.mxu0 0
    %131 = vmatprep.subr.bf16.mxu0 0
    %132 = vmatpush2.bf16.msra.mxu0 0
    %133 = vmatprep.mubr.bf16.mxu0 0
    %134 = vmatmul.mubr.bf16.gmra.mxu0 %v92
    %v135 = vpop.f32.mrf.mxu0
    %v136 = vadd.f32 %v59, %v135
    %v137 = vpop.f32.mrf.mxu0
    %v138 = vpop.f32.mrf.mxu0
    %v139 = vpop.f32.mrf.mxu0
    %140 = vdwg.mxu0
    %v141 = vpack.c.bf16 %v136, %v136
    %vm142 = vcmp.gt.bf16.partialorder %v141, 0
    %v143 = vmul.bf16 %v141, 1009007652
    %v144 = vsel %vm142, %v141, %v143
    %v145 = vld [vmem:[%s3] sm:$0xf]
    %v146 = vld [vmem:[%s3 + $0x4] sm:$0xf]
    %v147 = vld [vmem:[%s3 + $0x8] sm:$0xf]
    %v148 = vld [vmem:[%s3 + $0xc] sm:$0xf]
    %v149 = vld [vmem:[%s3 + $0x10] sm:$0xf]
    %v150 = vld [vmem:[%s3 + $0x14] sm:$0xf]
    %v151 = vld [vmem:[%s3 + $0x18] sm:$0xf]
    %v152 = vld [vmem:[%s3 + $0x1c] sm:$0xf]
    %v153 = vld [vmem:[%s3 + $0x20] sm:$0xf]
    %v154 = vld [vmem:[%s3 + $0x24] sm:$0xf]
    %v155 = vld [vmem:[%s3 + $0x28] sm:$0xf]
    %v156 = vld [vmem:[%s3 + $0x2c] sm:$0xf]
    %v157 = vld [vmem:[%s3 + $0x30] sm:$0xf]
    %v158 = vld [vmem:[%s3 + $0x34] sm:$0xf]
    %v159 = vld [vmem:[%s3 + $0x38] sm:$0xf]
    %v160 = vld [vmem:[%s3 + $0x3c] sm:$0xf]
    %v161 = vld [vmem:[%s4] sm:$0x1]
    %v163 = vlaneseq
    %v164 = vshrl.u32 %v163, 7
    %v165 = vsub.s32 0, %v164
    %v166 = vrot.slane %v161, %v165
    %v184 = vunpack.c.l.b16 %v145
    %v185 = vunpack.c.l.b16 %v146
    %v186 = vunpack.c.l.b16 %v147
    %v187 = vunpack.c.l.b16 %v148
    %v188 = vunpack.c.l.b16 %v149
    %v189 = vunpack.c.l.b16 %v150
    %v190 = vunpack.c.l.b16 %v151
    %v191 = vunpack.c.l.b16 %v152
    %v192 = vunpack.c.l.b16 %v153
    %v193 = vunpack.c.l.b16 %v154
    %v194 = vunpack.c.l.b16 %v155
    %v195 = vunpack.c.l.b16 %v156
    %v196 = vunpack.c.l.b16 %v157
    %v197 = vunpack.c.l.b16 %v158
    %v198 = vunpack.c.l.b16 %v159
    %v199 = vunpack.c.l.b16 %v160
    %v200 = vpack.c.b16 %v185, %v184
    %v201 = vpack.c.b16 %v187, %v186
    %v202 = vpack.c.b16 %v189, %v188
    %v203 = vpack.c.b16 %v191, %v190
    %v204 = vpack.c.b16 %v193, %v192
    %v205 = vpack.c.b16 %v195, %v194
    %v206 = vpack.c.b16 %v197, %v196
    %v207 = vpack.c.b16 %v199, %v198
    %216 = vmatprep.subr.bf16.mxu0 0
    %217 = vmatpush1.bf16.msra.mxu0 %v207
    %218 = vmatprep.subr.bf16.mxu0 0
    %219 = vmatpush1.bf16.msra.mxu0 %v206
    %220 = vmatprep.subr.bf16.mxu0 0
    %221 = vmatpush1.bf16.msra.mxu0 %v205
    %222 = vmatprep.subr.bf16.mxu0 0
    %223 = vmatpush1.bf16.msra.mxu0 %v204
    %224 = vmatprep.subr.bf16.mxu0 0
    %225 = vmatpush1.bf16.msra.mxu0 %v203
    %226 = vmatprep.subr.bf16.mxu0 0
    %227 = vmatpush1.bf16.msra.mxu0 %v202
    %228 = vmatprep.subr.bf16.mxu0 0
    %229 = vmatpush1.bf16.msra.mxu0 %v201
    %230 = vmatprep.subr.bf16.mxu0 0
    %231 = vmatpush1.bf16.msra.mxu0 %v200
    %232 = vmatprep.subr.bf16.mxu0 0
    %233 = vmatpush2.bf16.msra.mxu0 0
    %234 = vmatprep.subr.bf16.mxu0 0
    %235 = vmatpush2.bf16.msra.mxu0 0
    %236 = vmatprep.subr.bf16.mxu0 0
    %237 = vmatpush2.bf16.msra.mxu0 0
    %238 = vmatprep.subr.bf16.mxu0 0
    %239 = vmatpush2.bf16.msra.mxu0 0
    %240 = vmatprep.subr.bf16.mxu0 0
    %241 = vmatpush2.bf16.msra.mxu0 0
    %242 = vmatprep.subr.bf16.mxu0 0
    %243 = vmatpush2.bf16.msra.mxu0 0
    %244 = vmatprep.subr.bf16.mxu0 0
    %245 = vmatpush2.bf16.msra.mxu0 0
    %246 = vmatprep.subr.bf16.mxu0 0
    %247 = vmatpush2.bf16.msra.mxu0 0
    %248 = vmatprep.mubr.bf16.mxu0 0
    %249 = vmatmul.mubr.bf16.gmra.mxu0 %v144
    %v250 = vpop.f32.mrf.mxu0
    %v251 = vadd.f32 %v166, %v250
    %v252 = vpop.f32.mrf.mxu0
    %v253 = vpop.f32.mrf.mxu0
    %v254 = vpop.f32.mrf.mxu0
    %255 = vdwg.mxu0
    %v256 = vpack.c.bf16 %v251, %v251
    %vm257 = vcmp.gt.bf16.partialorder %v256, 0
    %v258 = vmul.bf16 %v256, 1009007652
    %v259 = vsel %vm257, %v256, %v258
    %v260 = vld [vmem:[%s5] sm:$0xf]
    %v261 = vld [vmem:[%s5 + $0x4] sm:$0xf]
    %v262 = vld [vmem:[%s5 + $0x8] sm:$0xf]
    %v263 = vld [vmem:[%s5 + $0xc] sm:$0xf]
    %v264 = vld [vmem:[%s5 + $0x10] sm:$0xf]
    %v265 = vld [vmem:[%s5 + $0x14] sm:$0xf]
    %v266 = vld [vmem:[%s5 + $0x18] sm:$0xf]
    %v267 = vld [vmem:[%s5 + $0x1c] sm:$0xf]
    %v268 = vld [vmem:[%s5 + $0x20] sm:$0xf]
    %v269 = vld [vmem:[%s5 + $0x24] sm:$0xf]
    %v270 = vld [vmem:[%s5 + $0x28] sm:$0xf]
    %v271 = vld [vmem:[%s5 + $0x2c] sm:$0xf]
    %v272 = vld [vmem:[%s5 + $0x30] sm:$0xf]
    %v273 = vld [vmem:[%s5 + $0x34] sm:$0xf]
    %v274 = vld [vmem:[%s5 + $0x38] sm:$0xf]
    %v275 = vld [vmem:[%s5 + $0x3c] sm:$0xf]
    %v276 = vld [vmem:[%s6] sm:$0x1]
    %v278 = vlaneseq
    %v279 = vshrl.u32 %v278, 7
    %v280 = vsub.s32 0, %v279
    %v281 = vrot.slane %v276, %v280
    %v299 = vunpack.c.l.b16 %v260
    %v300 = vunpack.c.l.b16 %v261
    %v301 = vunpack.c.l.b16 %v262
    %v302 = vunpack.c.l.b16 %v263
    %v303 = vunpack.c.l.b16 %v264
    %v304 = vunpack.c.l.b16 %v265
    %v305 = vunpack.c.l.b16 %v266
    %v306 = vunpack.c.l.b16 %v267
    %v307 = vunpack.c.l.b16 %v268
    %v308 = vunpack.c.l.b16 %v269
    %v309 = vunpack.c.l.b16 %v270
    %v310 = vunpack.c.l.b16 %v271
    %v311 = vunpack.c.l.b16 %v272
    %v312 = vunpack.c.l.b16 %v273
    %v313 = vunpack.c.l.b16 %v274
    %v314 = vunpack.c.l.b16 %v275
    %v315 = vpack.c.b16 %v300, %v299
    %v316 = vpack.c.b16 %v302, %v301
    %v317 = vpack.c.b16 %v304, %v303
    %v318 = vpack.c.b16 %v306, %v305
    %v319 = vpack.c.b16 %v308, %v307
    %v320 = vpack.c.b16 %v310, %v309
    %v321 = vpack.c.b16 %v312, %v311
    %v322 = vpack.c.b16 %v314, %v313
    %331 = vmatprep.subr.bf16.mxu0 0
    %332 = vmatpush1.bf16.msra.mxu0 %v322
    %333 = vmatprep.subr.bf16.mxu0 0
    %334 = vmatpush1.bf16.msra.mxu0 %v321
    %335 = vmatprep.subr.bf16.mxu0 0
    %336 = vmatpush1.bf16.msra.mxu0 %v320
    %337 = vmatprep.subr.bf16.mxu0 0
    %338 = vmatpush1.bf16.msra.mxu0 %v319
    %339 = vmatprep.subr.bf16.mxu0 0
    %340 = vmatpush1.bf16.msra.mxu0 %v318
    %341 = vmatprep.subr.bf16.mxu0 0
    %342 = vmatpush1.bf16.msra.mxu0 %v317
    %343 = vmatprep.subr.bf16.mxu0 0
    %344 = vmatpush1.bf16.msra.mxu0 %v316
    %345 = vmatprep.subr.bf16.mxu0 0
    %346 = vmatpush1.bf16.msra.mxu0 %v315
    %347 = vmatprep.subr.bf16.mxu0 0
    %348 = vmatpush2.bf16.msra.mxu0 0
    %349 = vmatprep.subr.bf16.mxu0 0
    %350 = vmatpush2.bf16.msra.mxu0 0
    %351 = vmatprep.subr.bf16.mxu0 0
    %352 = vmatpush2.bf16.msra.mxu0 0
    %353 = vmatprep.subr.bf16.mxu0 0
    %354 = vmatpush2.bf16.msra.mxu0 0
    %355 = vmatprep.subr.bf16.mxu0 0
    %356 = vmatpush2.bf16.msra.mxu0 0
    %357 = vmatprep.subr.bf16.mxu0 0
    %358 = vmatpush2.bf16.msra.mxu0 0
    %359 = vmatprep.subr.bf16.mxu0 0
    %360 = vmatpush2.bf16.msra.mxu0 0
    %361 = vmatprep.subr.bf16.mxu0 0
    %362 = vmatpush2.bf16.msra.mxu0 0
    %363 = vmatprep.mubr.bf16.mxu0 0
    %364 = vmatmul.mubr.bf16.gmra.mxu0 %v259
    %v365 = vpop.f32.mrf.mxu0
    %v366 = vadd.f32 %v281, %v365
    %v367 = vpop.f32.mrf.mxu0
    %v368 = vpop.f32.mrf.mxu0
    %v369 = vpop.f32.mrf.mxu0
    %370 = vdwg.mxu0
    %vm371 = vcmask 68608
    %372 = vst.msk [vmem:[#allocation5] sm:$0xf] %vm371, %v366
    // Predicated region
    $region34: #{net_forward.1} parent=1 // pred_check
      _
    $region35: #{net_forward.1} parent=1 // pred_check_branch
      %374 = sbr.rel (0) target = $region37
    $region36: #{net_forward.1} parent=1 // pred_region
      %s376 = ssub.s32 64, 64
      %377 = vsyncadd [#allocation4], %s376
      %s379 = sshll.u32 [#allocation5], 4
      %s380 = int_to_ptr.vmem [resolvable:$true] %s379
      %382 = dma.vmem_to_hbm [thread:$0]  %s380, 64, %s7, [#allocation4]
    $region37: #{net_forward.1} parent=1 // pred_fallthru
      _
    // Predicated region
    $region38: #{net_forward.1} parent=1 // pred_check
      _
    $region39: #{net_forward.1} parent=1 // pred_check_branch
      %384 = sbr.rel (0) target = $region41
    $region40: #{net_forward.1} parent=1 // pred_region
      %385 = dma.done [#allocation4], 64
    $region41: #{net_forward.1} parent=1 // pred_fallthru
      _
    %386 = vsyncpa [#allocation3], 1
    %387 = vsyncpa [#allocation4], 1

</llo_original>
